<compile_context>
chip_gen: v5e
topology: v5e:2x2
jax: 0.10.0
libtpu: 0.0.40
codegen_flags: <defaults>
</compile_context>

<pallas_src>
import functools

import jax
import jax.numpy as jnp
from jax import lax
from jax.experimental import pallas as pl
from jax.experimental.pallas import tpu as pltpu


def head_kernel(x_ref, w_ref, o_ref, *, T, C, H):
    # x_ref: (T, C) bf16 -- one batch.  w_ref: (C, 3H) bf16 = [Wq | Wk | Wv].
    # o_ref: (T, H) f32 output block for this batch.
    x = x_ref[...]
    w = w_ref[...]

    # Fused QKV projection on the MXU: bf16 operands, f32 accumulation.
    qkv = jnp.dot(x, w, preferred_element_type=jnp.float32)           # (T, 3H) f32

    scale = jnp.float32(C ** -0.5)
    q = qkv[:, 0:H] * scale          # scale the (T,H) q instead of (T,T) scores
    k = qkv[:, H:2 * H]
    v = qkv[:, 2 * H:3 * H]

    # Scores q @ k^T without materializing a transpose (contract last dims).
    s = lax.dot_general(q, k, (((1,), (1,)), ((), ())),
                        preferred_element_type=jnp.float32)           # (T, T)

    # Causal mask: large finite negative (never produces NaN via (-inf)-(-inf)).
    row = lax.broadcasted_iota(jnp.int32, (T, T), 0)
    col = lax.broadcasted_iota(jnp.int32, (T, T), 1)
    s = jnp.where(row >= col, s, jnp.float32(-1e30))

    # Numerically-stable softmax, strictly f32 (v5e has no bf16 VPU/EUP).
    m = jnp.max(s, axis=-1, keepdims=True)
    p = jnp.exp(s - m)
    attn = p / jnp.sum(p, axis=-1, keepdims=True)   # exact divide (approx
                                                    # reciprocal gave ~5e-3 err)

    # dropout(p=0.0) is the identity (eval mode).

    out = jnp.dot(attn, v, preferred_element_type=jnp.float32)        # (T, H)
    o_ref[...] = out.astype(o_ref.dtype)


def head_forward(x, wq, wk, wv):
    """x: (B, T, C) f32; wq/wk/wv: (C, H) pre-transposed Linear weights -> (B, T, H) f32."""
    B, T, C = x.shape
    H = wq.shape[1]

    # Fuse the three projection weights into one (C, 3H) slab and cast the MXU
    # operands to bf16 (free layout/precision plumbing in the wrapper).
    w_qkv = jnp.concatenate([wq, wk, wv], axis=1).astype(jnp.bfloat16)   # (C, 3H)
    x_bf16 = x.astype(jnp.bfloat16)                                      # (B, T, C)

    kernel = functools.partial(head_kernel, T=T, C=C, H=H)

    flops = 2 * B * T * C * (3 * H) + 2 * (2 * B * T * T * H)
    bytes_accessed = x_bf16.size * 2 + w_qkv.size * 2 + B * T * H * 4
    cost = pl.CostEstimate(flops=flops,
                           transcendentals=B * T * T,
                           bytes_accessed=bytes_accessed)

    out = pl.pallas_call(
        kernel,
        out_shape=jax.ShapeDtypeStruct((B, T, H), x.dtype),
        grid=(B,),
        in_specs=[
            # One batch of activations per grid step (batch dim squeezed).
            pl.BlockSpec((None, T, C), lambda b: (b, 0, 0),
                         memory_space=pltpu.MemorySpace.VMEM),
            # Fused QKV weight: constant block, stays resident in VMEM.
            pl.BlockSpec((C, 3 * H), lambda b: (0, 0),
                         memory_space=pltpu.MemorySpace.VMEM),
        ],
        out_specs=pl.BlockSpec((None, T, H), lambda b: (b, 0, 0),
                               memory_space=pltpu.MemorySpace.VMEM),
        compiler_params=pltpu.CompilerParams(
            dimension_semantics=("parallel",),     # batches independent -> v7x 2 TCs
            vmem_limit_bytes=16 * 1024 * 1024,     # explicit budget; fits all chips
        ),
        cost_estimate=cost,
    )(x_bf16, w_qkv)
    return out


def reference_head(x, wq, wk, wv, *, cast_mxu_inputs=False):
    """Pure-JAX reference.  cast_mxu_inputs=True mirrors the kernel's bf16
    matmul operands (with f32 accumulation) for a tight numerical comparison;
    False is the straight f32 PyTorch-equivalent math."""
    B, T, C = x.shape
    if cast_mxu_inputs:
        xp = x.astype(jnp.bfloat16)
        wqp, wkp, wvp = (w.astype(jnp.bfloat16) for w in (wq, wk, wv))
    else:
        xp, wqp, wkp, wvp = x, wq, wk, wv
    q = jnp.dot(xp, wqp, preferred_element_type=jnp.float32)
    k = jnp.dot(xp, wkp, preferred_element_type=jnp.float32)
    v = jnp.dot(xp, wvp, preferred_element_type=jnp.float32)
    wei = jnp.einsum("btd,bsd->bts", q, k) * C ** (-0.5)
    mask = jnp.tril(jnp.ones((T, T), dtype=bool))
    wei = jnp.where(mask, wei, -jnp.inf)
    wei = jax.nn.softmax(wei, axis=-1)
    return jnp.einsum("bts,bsh->bth", wei, v)


if __name__ == "__main__":
    # hp-equivalent hyperparameters (small, consistent with the module)
    n_embd = 32       # C
    block_size = 8    # T
    head_size = 16    # H
    batch = 2         # B

    key = jax.random.PRNGKey(0)
    kx, kk, kq, kv = jax.random.split(key, 4)

    x = jax.random.normal(kx, (batch, block_size, n_embd), dtype=jnp.float32)
    # Deterministic weight init; stored pre-transposed as (C, H).
    wk = jax.random.normal(kk, (n_embd, head_size), dtype=jnp.float32) * (n_embd ** -0.5)
    wq = jax.random.normal(kq, (n_embd, head_size), dtype=jnp.float32) * (n_embd ** -0.5)
    wv = jax.random.normal(kv, (n_embd, head_size), dtype=jnp.float32) * (n_embd ** -0.5)

    out = head_forward(x, wq, wk, wv)
    out = jax.block_until_ready(out)

    assert out.shape == (batch, block_size, head_size)
    assert bool(jnp.all(jnp.isfinite(out)))

    # (1) Tight check against a reference using the same bf16 MXU-operand cast
    #     (verifies the kernel's attention math exactly).
    ref_matched = reference_head(x, wq, wk, wv, cast_mxu_inputs=True)
    err_matched = float(jnp.max(jnp.abs(out - ref_matched)))
    assert jnp.allclose(out, ref_matched, atol=2e-3, rtol=2e-3), err_matched

    # (2) Looser check against the pure-f32 reference (documents the bf16
    #     input-rounding effect, ~1e-2 absolute at these magnitudes).
    ref_f32 = reference_head(x, wq, wk, wv, cast_mxu_inputs=False)
    err_f32 = float(jnp.max(jnp.abs(out - ref_f32)))
    assert jnp.allclose(out, ref_f32, atol=5e-2, rtol=5e-2), err_f32

    print("KERNEL_OK")
</pallas_src>

<mosaic_0001>
module attributes {stable_mosaic.version = 11 : i64} {
  func.func @head_kernel(%arg0: i32, %arg1: memref<1x8x32xbf16, #tpu.memory_space<vmem>>, %arg2: memref<32x48xbf16, #tpu.memory_space<vmem>>, %arg3: memref<1x8x16xf32, #tpu.memory_space<vmem>>) attributes {dimension_semantics = [#tpu.dimension_semantics<parallel>], iteration_bounds = array<i64: 2>, scalar_prefetch = 0 : i64, scratch_operands = 0 : i64, tpu.core_type = #tpu.core_type<tc>, window_params = [{transform_indices = @transform_0, window_bounds = array<i64: 1, 8, 32>}, {pipeline_mode = #tpu.pipeline_mode<synchronous>, transform_indices = @transform_1, window_bounds = array<i64: 32, 48>}, {transform_indices = @transform_2, window_bounds = array<i64: 1, 8, 16>}]} {
    %c0 = arith.constant 0 : index
    %c0_0 = arith.constant 0 : index
    %c0_1 = arith.constant 0 : index
    %0 = vector.load %arg1[%c0, %c0_0, %c0_1] : memref<1x8x32xbf16, #tpu.memory_space<vmem>>, vector<1x8x32xbf16>
    %1 = vector.shape_cast %0 : vector<1x8x32xbf16> to vector<8x32xbf16>
    %c0_2 = arith.constant 0 : index
    %c0_3 = arith.constant 0 : index
    %2 = vector.load %arg2[%c0_2, %c0_3] : memref<32x48xbf16, #tpu.memory_space<vmem>>, vector<32x48xbf16>
    %cst = arith.constant dense<0.000000e+00> : vector<8x48xf32>
    %3 = tpu.matmul %1, %2, %cst {dimension_numbers = #tpu.dot_dimension_numbers<[1], [0], [0], [1], [0, 0, 1, 1], [], []>} : vector<8x32xbf16>, vector<32x48xbf16>, vector<8x48xf32> -> vector<8x48xf32>
    %4 = vector.extract_strided_slice %3 {offsets = [0, 0], sizes = [8, 16], strides = [1, 1]} : vector<8x48xf32> to vector<8x16xf32>
    %cst_4 = arith.constant 0.176776692 : f32
    %5 = vector.broadcast %cst_4 : f32 to vector<8x16xf32>
    %6 = arith.mulf %4, %5 : vector<8x16xf32>
    %7 = vector.extract_strided_slice %3 {offsets = [0, 16], sizes = [8, 16], strides = [1, 1]} : vector<8x48xf32> to vector<8x16xf32>
    %8 = vector.extract_strided_slice %3 {offsets = [0, 32], sizes = [8, 16], strides = [1, 1]} : vector<8x48xf32> to vector<8x16xf32>
    %cst_5 = arith.constant dense<0.000000e+00> : vector<8x8xf32>
    %9 = tpu.matmul %6, %7, %cst_5 {dimension_numbers = #tpu.dot_dimension_numbers<[1], [1], [0], [0], [0, 0, 1, 0], [], []>} : vector<8x16xf32>, vector<8x16xf32>, vector<8x8xf32> -> vector<8x8xf32>
    %10 = tpu.iota {dimensions = array<i32: 0>} : vector<8x8xi32>
    %11 = tpu.iota {dimensions = array<i32: 1>} : vector<8x8xi32>
    %12 = arith.cmpi sge, %10, %11 : vector<8x8xi32>
    %cst_6 = arith.constant -1.000000e+30 : f32
    %13 = vector.broadcast %cst_6 : f32 to vector<8x8xf32>
    %14 = arith.select %12, %9, %13 : vector<8x8xi1>, vector<8x8xf32>
    %cst_7 = arith.constant dense<0xFF800000> : vector<8xf32>
    %15 = vector.multi_reduction <maximumf>, %14, %cst_7 [1] : vector<8x8xf32> to vector<8xf32>
    %16 = vector.shape_cast %15 : vector<8xf32> to vector<8x1xf32>
    %17 = vector.broadcast %16 : vector<8x1xf32> to vector<8x8xf32>
    %18 = arith.subf %14, %17 : vector<8x8xf32>
    %19 = math.exp %18 : vector<8x8xf32>
    %cst_8 = arith.constant dense<0.000000e+00> : vector<8xf32>
    %20 = vector.multi_reduction <add>, %19, %cst_8 [1] : vector<8x8xf32> to vector<8xf32>
    %21 = vector.shape_cast %20 : vector<8xf32> to vector<8x1xf32>
    %22 = vector.broadcast %21 : vector<8x1xf32> to vector<8x8xf32>
    %23 = arith.divf %19, %22 : vector<8x8xf32>
    %cst_9 = arith.constant dense<0.000000e+00> : vector<8x16xf32>
    %24 = tpu.matmul %23, %8, %cst_9 {dimension_numbers = #tpu.dot_dimension_numbers<[1], [0], [0], [1], [0, 0, 1, 1], [], []>} : vector<8x8xf32>, vector<8x16xf32>, vector<8x16xf32> -> vector<8x16xf32>
    %c0_10 = arith.constant 0 : index
    %c0_11 = arith.constant 0 : index
    %c0_12 = arith.constant 0 : index
    %25 = vector.load %arg3[%c0_10, %c0_11, %c0_12] : memref<1x8x16xf32, #tpu.memory_space<vmem>>, vector<1x8x16xf32>
    %26 = vector.shape_cast %25 : vector<1x8x16xf32> to vector<8x16xf32>
    %27 = vector.shape_cast %24 : vector<8x16xf32> to vector<1x8x16xf32>
    tpu.vector_store %arg3[%c0_10, %c0_11, %c0_12], %27 {strides = array<i32>} : memref<1x8x16xf32, #tpu.memory_space<vmem>>, vector<1x8x16xf32>,
    return
  }
  func.func @transform_0(%arg0: i32) -> (i32, i32, i32) {
    %c0_i32 = arith.constant 0 : i32
    %c0_i32_0 = arith.constant 0 : i32
    %c0_i32_1 = arith.constant 0 : i32
    return %arg0, %c0_i32, %c0_i32_0 : i32, i32, i32
  }
  func.func @transform_1(%arg0: i32) -> (i32, i32) {
    %c0_i32 = arith.constant 0 : i32
    %c0_i32_0 = arith.constant 0 : i32
    %c0_i32_1 = arith.constant 0 : i32
    return %c0_i32, %c0_i32_0 : i32, i32
  }
  func.func @transform_2(%arg0: i32) -> (i32, i32, i32) {
    %c0_i32 = arith.constant 0 : i32
    %c0_i32_0 = arith.constant 0 : i32
    %c0_i32_1 = arith.constant 0 : i32
    return %arg0, %c0_i32, %c0_i32_0 : i32, i32, i32
  }
}

</mosaic_0001>

<llo_original>
// kernel: tpu_custom_call.1
$region0: #{tpu_custom_call.1}
  #allocation0 [shape = 'u32[]', space=smem, size = 0x4, offset = 0x4, fixed_abs, tag = 'smem constant byte address 0x4 - core index']
  #allocation1 [shape = 'u32[72,128]{1,0:T(1,128)}', space=vmem, size = 0x9000, scoped, tag = 'internal scratch']
  %s0 = inlined_call_operand.hbm [shape: bf16[2,8,32], index: 0, kind: input, shape index: {}]
  %s1 = inlined_call_operand.hbm [shape: bf16[32,48], index: 1, kind: input, shape index: {}]
  %s2 = inlined_call_operand.hbm [shape: f32[2,8,16], index: 2, kind: output, shape index: {}]
  %s3 = sld [smem:[#allocation0]]
  $region49: #{tpu_custom_call.1} parent=0
    _
  %s5 = ssub.s32 1, %s3
  %s6 = scalar_select 0, %s5, %s3
  $region1: #{tpu_custom_call.1} parent=0
    #allocation2 [shape = 'u8[4096]{0}', space=vmem, size = 0x1000, scoped, tag = 'input window, operand 0']
    #allocation3 [shape = 's32[2]{0}', space=sflag, size = 0x8, scoped, tag = 'scoped memory for tpu_custom_call.1']
    #allocation4 [shape = 's32[2]{0}', space=sflag, size = 0x8, scoped, tag = 'scoped memory for tpu_custom_call.1']
    #allocation5 [shape = 'u8[8192]{0}', space=vmem, size = 0x2000, scoped, tag = 'input window, operand 1, single buffered']
    #allocation6 [shape = 's32[1]{0}', space=sflag, size = 0x4, scoped, tag = 'scoped memory for tpu_custom_call.1']
    #allocation7 [shape = 'u8[8192]{0}', space=vmem, size = 0x2000, scoped, tag = 'output window, operand 0']
    %7 = vsyncpa [#allocation3], 0
    %s8 = scalar_lea.sflag [#allocation3], 1
    %9 = vsyncpa %s8, 0
    %10 = vsyncpa [#allocation6], 0
    %11 = vsyncpa [#allocation4], 0
    %s12 = scalar_lea.sflag [#allocation4], 1
    %13 = vsyncpa %s12, 0
    loop: start=0, step=1, limit=4
    $region2: #{tpu_custom_call.1} parent=1 // loop_pre_header
      _
    $region3: #{tpu_custom_call.1} parent=1 // loop_header
      %s15 = sphi 0, %s19
      %p16 = scmp.ge.s32.totalorder %s15, 4
      %s25 = sphi 0, %s27
      %s28 = sphi 0, %s25
      %s29 = sphi 0, %s28
      %s45 = sphi 0, %s29
      %s49 = sphi 0, %s49
      %s51 = sphi 0, %s49
      %s52 = sphi 0, %s51
      %s66 = sphi 0, %s52
      %s72 = sphi 0, %s74
      %s75 = sphi 0, %s72
      %s76 = sphi 0, %s75
      %s92 = sphi 0, %s76
    $region4: #{tpu_custom_call.1} parent=1 // loop_header_branch
      %18 = sbr.rel (%p16) target = $region8
    $region5: #{tpu_custom_call.1} parent=1 // loop_body
      %s20 = ssub.s32 %s15, 1
      %s21 = ssub.s32 %s15, 2
      %s22 = sadd.s32 %s15, 1
      %s23 = ssub.s32 %s15, %s22
      %p24 = scmp.eq.s32.totalorder %s23, 0
      %s26 = sadd.s32 %s25, 1
      %s27 = scalar_select %p24, %s25, %s26
      %p30 = pneg %p24
      %p31 = scmp.eq.s32.totalorder %s15, 1
      %p32 = por %p30, %p31
      %p33 = scmp.ne.s32.totalorder %s25, %s28
      %p34 = scmp.eq.s32.totalorder %s15, 0
      %p35 = por %p33, %p34
      %p36 = scmp.ne.s32.totalorder %s25, %s28
      %p37 = scmp.eq.s32.totalorder %s20, 1
      %p38 = por %p36, %p37
      %p39 = scmp.ne.s32.totalorder %s28, %s29
      %p40 = scmp.eq.s32.totalorder %s20, 0
      %p41 = por %p39, %p40
      %p42 = scmp.ne.s32.totalorder %s28, %s29
      %p43 = scmp.eq.s32.totalorder %s21, 1
      %p44 = por %p42, %p43
      %p46 = scmp.ne.s32.totalorder %s29, %s45
      %p47 = scmp.eq.s32.totalorder %s21, 0
      %p48 = por %p46, %p47
      %s50 = sadd.s32 %s49, 1
      %p53 = scmp.eq.s32.totalorder %s15, 1
      %p54 = scmp.ne.s32.totalorder %s49, %s51
      %p55 = scmp.eq.s32.totalorder %s15, 0
      %p56 = por %p54, %p55
      %p57 = scmp.ne.s32.totalorder %s49, %s51
      %p58 = scmp.eq.s32.totalorder %s20, 1
      %p59 = por %p57, %p58
      %p60 = scmp.ne.s32.totalorder %s51, %s52
      %p61 = scmp.eq.s32.totalorder %s20, 0
      %p62 = por %p60, %p61
      %p63 = scmp.ne.s32.totalorder %s51, %s52
      %p64 = scmp.eq.s32.totalorder %s21, 1
      %p65 = por %p63, %p64
      %p67 = scmp.ne.s32.totalorder %s52, %s66
      %p68 = scmp.eq.s32.totalorder %s21, 0
      %p69 = por %p67, %p68
      %s70 = ssub.s32 %s15, %s22
      %p71 = scmp.eq.s32.totalorder %s70, 0
      %s73 = sadd.s32 %s72, 1
      %s74 = scalar_select %p71, %s72, %s73
      %p77 = pneg %p71
      %p78 = scmp.eq.s32.totalorder %s15, 1
      %p79 = por %p77, %p78
      %p80 = scmp.ne.s32.totalorder %s72, %s75
      %p81 = scmp.eq.s32.totalorder %s15, 0
      %p82 = por %p80, %p81
      %p83 = scmp.ne.s32.totalorder %s72, %s75
      %p84 = scmp.eq.s32.totalorder %s20, 1
      %p85 = por %p83, %p84
      %p86 = scmp.ne.s32.totalorder %s75, %s76
      %p87 = scmp.eq.s32.totalorder %s20, 0
      %p88 = por %p86, %p87
      %p89 = scmp.ne.s32.totalorder %s75, %s76
      %p90 = scmp.eq.s32.totalorder %s21, 1
      %p91 = por %p89, %p90
      %p93 = scmp.ne.s32.totalorder %s76, %s92
      %p94 = scmp.eq.s32.totalorder %s21, 0
      %p95 = por %p93, %p94
      %p96 = scmp.le.s32.totalorder 1, %s15
      %p97 = scmp.lt.s32.totalorder %s15, 3
      %p98 = pnand %p96, %p97
      %p99 = pneg %p98
      // Predicated region
      $region9: #{tpu_custom_call.1} parent=5 // pred_check
        _
      $region10: #{tpu_custom_call.1} parent=5 // pred_check_branch
        %101 = sbr.rel (%p98) target = $region12
      $region11: #{tpu_custom_call.1} parent=5 // pred_region
        %s102 = ssub.s32 %s15, 1
        // Predicated region
        $region13: #{tpu_custom_call.1} parent=11 // pred_check
          %p103 = pneg %p62
        $region14: #{tpu_custom_call.1} parent=11 // pred_check_branch
          %105 = sbr.rel (%p103) target = $region16
        $region15: #{tpu_custom_call.1} parent=11 // pred_region
          %107 = vsyncadd [#allocation6], 0
          %s108 = sshll.u32 %s1, 4
          %s109 = int_to_ptr.hbm [resolvable:$true] %s108
          %s110 = sshll.u32 [#allocation5], 4
          %s111 = int_to_ptr.vmem [resolvable:$true] %s110
          %116 = dma.hbm_to_vmem [thread:$0]  %s109, 256, %s111, [#allocation6], 64, 64, 4
        $region16: #{tpu_custom_call.1} parent=11 // pred_fallthru
          _
      $region12: #{tpu_custom_call.1} parent=5 // pred_fallthru
        _
      %p117 = scmp.lt.s32.totalorder %s15, 2
      // Predicated region
      $region17: #{tpu_custom_call.1} parent=5 // pred_check
        %p118 = pneg %p117
      $region18: #{tpu_custom_call.1} parent=5 // pred_check_branch
        %120 = sbr.rel (%p118) target = $region20
      $region19: #{tpu_custom_call.1} parent=5 // pred_region
        // Predicated region
        $region21: #{tpu_custom_call.1} parent=19 // pred_check
          %p121 = pneg %p35
        $region22: #{tpu_custom_call.1} parent=19 // pred_check_branch
          %123 = sbr.rel (%p121) target = $region24
        $region23: #{tpu_custom_call.1} parent=19 // pred_region
          %s124 = sand.u32 %s25, 1
          %s125 = scalar_lea.sflag [#allocation3], %s124
          %s126 = sand.u32 %s25, 1
          %s127 = smul.addr %s126, 4
          %s128 = scalar_lea.vmem [#allocation2], %s127
          %130 = vsyncadd %s125, 0
          %s131 = smul.addr %s15, 4
          %s132 = scalar_lea.hbm %s0, %s131
          %s134 = sshll.u32 %s132, 4
          %s135 = int_to_ptr.hbm [resolvable:$true] %s134
          %s136 = sshll.u32 %s128, 4
          %s137 = int_to_ptr.vmem [resolvable:$true] %s136
          %139 = dma.hbm_to_vmem [thread:$0]  %s135, 64, %s137, %s125
        $region24: #{tpu_custom_call.1} parent=19 // pred_fallthru
          _
      $region20: #{tpu_custom_call.1} parent=5 // pred_fallthru
        _
      %p140 = scmp.le.s32.totalorder 1, %s15
      %p141 = scmp.lt.s32.totalorder %s15, 3
      %p142 = pnand %p140, %p141
      %p143 = pneg %p142
      // Predicated region
      $region25: #{tpu_custom_call.1} parent=5 // pred_check
        _
      $region26: #{tpu_custom_call.1} parent=5 // pred_check_branch
        %145 = sbr.rel (%p142) target = $region28
      $region27: #{tpu_custom_call.1} parent=5 // pred_region
        %s146 = ssub.s32 %s15, 1
        %s147 = sand.u32 %s28, 1
        %s148 = scalar_lea.sflag [#allocation3], %s147
        %s149 = sand.u32 %s28, 1
        %s150 = smul.addr %s149, 4
        %s151 = scalar_lea.vmem [#allocation2], %s150
        // Predicated region
        $region29: #{tpu_custom_call.1} parent=27 // pred_check
          %p152 = pneg %p41
        $region30: #{tpu_custom_call.1} parent=27 // pred_check_branch
          %154 = sbr.rel (%p152) target = $region32
        $region31: #{tpu_custom_call.1} parent=27 // pred_region
          %156 = dma.done %s148, 64
        $region32: #{tpu_custom_call.1} parent=27 // pred_fallthru
          _
        // Predicated region
        $region33: #{tpu_custom_call.1} parent=27 // pred_check
          %p157 = pneg %p62
        $region34: #{tpu_custom_call.1} parent=27 // pred_check_branch
          %159 = sbr.rel (%p157) target = $region36
        $region35: #{tpu_custom_call.1} parent=27 // pred_region
          %161 = dma.done [#allocation6], 256
        $region36: #{tpu_custom_call.1} parent=27 // pred_fallthru
          _
        %s162 = sand.u32 %s28, 1
        %s163 = scalar_lea.sflag [#allocation3], %s162
        %s164 = sand.u32 %s28, 1
        %s165 = smul.addr %s164, 4
        %s166 = scalar_lea.vmem [#allocation2], %s165
        %p167 = pneg %p41
        %p168 = pneg %p38
        %p169 = pneg %p62
        %p170 = pneg %p59
        %p171 = pneg %p88
        %p172 = pneg %p85
        %s173 = sand.u32 %s75, 1
        %s174 = scalar_lea.sflag [#allocation4], %s173
        %s175 = sand.u32 %s75, 1
        %s176 = smul.addr %s175, 8
        %s177 = scalar_lea.vmem [#allocation7], %s176
        %v179 = vld [vmem:[%s151] sm:$0xf]
        %v180 = vld [vmem:[#allocation5] sm:$0xf]
        %v181 = vld [vmem:[#allocation5 + $0x4] sm:$0xf]
        %v182 = vld [vmem:[#allocation5 + $0x8] sm:$0xf]
        %v183 = vld [vmem:[#allocation5 + $0xc] sm:$0xf]
        %v188 = vunpack.c.l.b16 %v180
        %v189 = vunpack.c.l.b16 %v181
        %v190 = vunpack.c.l.b16 %v182
        %v191 = vunpack.c.l.b16 %v183
        %v192 = vpack.c.b16 %v189, %v188
        %v193 = vpack.c.b16 %v191, %v190
        %vm196 = vcmask 261120
        %v198 = vsel %vm196, %v179, 0
        %200 = vmatpush.bf16.msra.mxu0 0
        %201 = vmatpush.bf16.msra.mxu0 0
        %202 = vmatpush.bf16.msra.mxu0 0
        %203 = vmatpush.bf16.msra.mxu0 0
        %204 = vmatpush.bf16.msra.mxu0 0
        %205 = vmatpush.bf16.msra.mxu0 0
        %206 = vmatpush.bf16.msra.mxu0 %v193
        %207 = vmatpush.bf16.msra.mxu0 %v192
        %208 = vmatmul.bf16.gmra.mxu0 %v198
        %v209 = vpop.f32.mrf.mxu0
        %v210 = vadd.f32 0.0, %v209
        %v211 = vpop.f32.mrf.mxu0
        %212 = vdwg.mxu0
        %v213 = vmul.f32 %v210, 0.17677669
        %215 = vrot.lane.b32.xlu0 %v210, 112
        %v216 = vpop.permute.xlu0 %215
        %vm217 = vcmask 130048
        %v219 = vsel %vm217, %v213, 0
        %v221 = vsel %vm217, %v216, 0
        %223 = vmatpush.xpose.msra.mxu0 0.0
        %224 = vmatpush.xpose.msra.mxu0 0.0
        %225 = vmatpush.xpose.msra.mxu0 0.0
        %226 = vmatpush.xpose.msra.mxu0 0.0
        %227 = vmatpush.xpose.msra.mxu0 0.0
        %228 = vmatpush.xpose.msra.mxu0 0.0
        %229 = vmatpush.xpose.msra.mxu0 0.0
        %230 = vmatpush.xpose.msra.mxu0 0.0
        %231 = vmatpush.xpose.msra.mxu0 0.0
        %232 = vmatpush.xpose.msra.mxu0 0.0
        %233 = vmatpush.xpose.msra.mxu0 0.0
        %234 = vmatpush.xpose.msra.mxu0 0.0
        %235 = vmatpush.xpose.msra.mxu0 0.0
        %236 = vmatpush.xpose.msra.mxu0 0.0
        %237 = vmatpush.xpose.msra.mxu0 0.0
        %238 = vmatpush.xpose.msra.mxu0 %v221
        %239 = vmatmul.f32.gmra.mxu0 %v219
        %v240 = vpop.f32.mrf.mxu0
        %v241 = vadd.f32 0.0, %v240
        %242 = vdwg.mxu0
        %v243 = vlaneseq
        %v244 = vshrl.u32 %v243, 7
        %v245 = vlaneseq
        %v246 = vand.u32 %v245, 127
        %vm247 = vcmp.ge.s32.totalorder %v244, %v246
        %v248 = vsel %vm247, %v241, -1e+30
        %vm249 = vcmask 64512
        %v250 = vsel %vm249, %v248, -inf
        %251 = vmax.xlane.f32.xlu0 %v250
        %v252 = vpop.xlane.xlu0 %251
        %v253 = vsub.f32 %v248, %v252
        %v254 = vmul.f32 %v253, 1.442695
        %v255 = vpow.pop %v254
        %v256 = vsel %vm249, %v255, 0.0
        %257 = vadd.xlane.f32.xlu0 %v256
        %v258 = vpop.xlane.xlu0 %257
        %v259 = vrcp.pop %v258
        %v260 = vmul.f32 %v258, %v259
        %v261 = vsub.f32 1.0, %v260
        %v262 = vmul.f32 %v259, %v261
        %v263 = vadd.f32 %v259, %v262
        %vm264 = vweird.f32 %v258
        %vm265 = vweird.f32 %v259
        %vm266 = vmor %vm264, %vm265
        %v267 = vsel %vm266, %v259, %v263
        %v268 = vand.u32 2147483647, %v258
        %vm269 = vcmp.eq.f32.partialorder %v268, 8.507059e+37
        %v270 = vand.u32 %v258, 2147483648
        %v271 = vor.u32 1.1754944e-38, %v270
        %v272 = vsel %vm269, %v271, %v267
        %v273 = vmul.f32 %v255, %v272
        %274 = vrot.lane.b32.xlu0 %v210, 96
        %v275 = vpop.permute.xlu0 %274
        %v278 = vsel %vm249, %v273, 0
        %280 = vmatpush.msra.mxu0 0.0
        %281 = vmatpush.msra.mxu0 0.0
        %282 = vmatpush.msra.mxu0 0.0
        %283 = vmatpush.msra.mxu0 0.0
        %284 = vmatpush.msra.mxu0 0.0
        %285 = vmatpush.msra.mxu0 0.0
        %286 = vmatpush.msra.mxu0 0.0
        %287 = vmatpush.msra.mxu0 0.0
        %288 = vmatpush.msra.mxu0 0.0
        %289 = vmatpush.msra.mxu0 0.0
        %290 = vmatpush.msra.mxu0 0.0
        %291 = vmatpush.msra.mxu0 0.0
        %292 = vmatpush.msra.mxu0 0.0
        %293 = vmatpush.msra.mxu0 0.0
        %294 = vmatpush.msra.mxu0 0.0
        %295 = vmatpush.msra.mxu0 %v275
        %296 = vmatmul.f32.gmra.mxu0 %v278
        %v297 = vpop.f32.mrf.mxu0
        %v298 = vadd.f32 0.0, %v297
        %299 = vdwg.mxu0
        %300 = vst.msk [vmem:[%s177] sm:$0xff] %vm217, %v298
        %s301 = sand.u32 %s75, 1
        %s302 = scalar_lea.sflag [#allocation4], %s301
        %s303 = sand.u32 %s75, 1
        %s304 = smul.addr %s303, 8
        %s305 = scalar_lea.vmem [#allocation7], %s304
        // Predicated region
        $region37: #{tpu_custom_call.1} parent=27 // pred_check
          %p306 = pneg %p85
        $region38: #{tpu_custom_call.1} parent=27 // pred_check_branch
          %308 = sbr.rel (%p306) target = $region40
        $region39: #{tpu_custom_call.1} parent=27 // pred_region
          %310 = vsyncadd %s302, 0
          %s311 = smul.addr %s20, 8
          %s312 = scalar_lea.hbm %s2, %s311
          %s314 = sshll.u32 %s305, 4
          %s315 = int_to_ptr.vmem [resolvable:$true] %s314
          %s316 = sshll.u32 %s312, 4
          %s317 = int_to_ptr.hbm [resolvable:$true] %s316
          %319 = dma.vmem_to_hbm [thread:$0]  %s315, 128, %s317, %s302
        $region40: #{tpu_custom_call.1} parent=27 // pred_fallthru
          _
      $region28: #{tpu_custom_call.1} parent=5 // pred_fallthru
        _
      %p320 = scmp.le.s32.totalorder 2, %s15
      // Predicated region
      $region41: #{tpu_custom_call.1} parent=5 // pred_check
        %p321 = pneg %p320
      $region42: #{tpu_custom_call.1} parent=5 // pred_check_branch
        %323 = sbr.rel (%p321) target = $region44
      $region43: #{tpu_custom_call.1} parent=5 // pred_region
        %s324 = ssub.s32 %s15, 2
        // Predicated region
        $region45: #{tpu_custom_call.1} parent=43 // pred_check
          %p325 = pneg %p91
        $region46: #{tpu_custom_call.1} parent=43 // pred_check_branch
          %327 = sbr.rel (%p325) target = $region48
        $region47: #{tpu_custom_call.1} parent=43 // pred_region
          %s328 = sand.u32 %s76, 1
          %s329 = scalar_lea.sflag [#allocation4], %s328
          %s330 = sand.u32 %s76, 1
          %s331 = smul.addr %s330, 8
          %s332 = scalar_lea.vmem [#allocation7], %s331
          %334 = dma.done %s329, 128
        $region48: #{tpu_custom_call.1} parent=43 // pred_fallthru
          _
      $region44: #{tpu_custom_call.1} parent=5 // pred_fallthru
        _
    $region6: #{tpu_custom_call.1} parent=1 // loop_footer
      %s19 = sadd.s32 1, %s15
    $region7: #{tpu_custom_call.1} parent=1 // loop_footer_branch
      %14 = sbr.rel target = $region3
    $region8: #{tpu_custom_call.1} parent=1 // loop_exit
      _
    %335 = vsyncpa [#allocation3], 1
    %s336 = scalar_lea.sflag [#allocation3], 1
    %337 = vsyncpa %s336, 1
    %338 = vsyncpa [#allocation6], 1
    %339 = vsyncpa [#allocation4], 1
    %s340 = scalar_lea.sflag [#allocation4], 1
    %341 = vsyncpa %s340, 1

</llo_original>
